<compile_context>
chip_gen: v5e
topology: v5e:2x2
jax: 0.10.0
libtpu: 0.0.40
codegen_flags: <defaults>
</compile_context>

<pallas_src>
import functools

import jax
import jax.numpy as jnp
from jax import lax
from jax.experimental import pallas as pl
from jax.experimental.pallas import tpu as pltpu

_LANES = 128
_SUBLANES = 8
_TILE = _SUBLANES * _LANES          # 1024 elements = one f32 vreg
_MAX_BLOCK_ROWS = 8192              # (8192, 128) f32 tile = 4 MiB per input per buffer


def _dice_partial_kernel(x_ref, t_ref, part_ref, *, block_rows, valid_rows,
                         needs_mask):
    """Per-block partial sums, reduced to lane/sublane-resident tiles.

    part_ref[0, :8, :]  = block-sum of sigmoid(x) * t   (intersection partial)
    part_ref[0, 8:, :]  = block-sum of sigmoid(x) + t   (denominator partial)
    Pure VPU adds; the tiny cross-lane reduction happens in the wrapper.
    No state is carried across grid steps.
    """
    x = x_ref[...].astype(jnp.float32)
    t = t_ref[...].astype(jnp.float32)
    # Exact sigmoid via a single EUP tanh (instead of exp + divide).
    s = 0.5 * jnp.tanh(0.5 * x) + 0.5

    def reduce_and_store(s_v, t_v):
        prod = (s_v * t_v).reshape(block_rows // _SUBLANES, _SUBLANES, _LANES)
        both = (s_v + t_v).reshape(block_rows // _SUBLANES, _SUBLANES, _LANES)
        part_ref[0, :_SUBLANES, :] = jnp.sum(prod, axis=0)
        part_ref[0, _SUBLANES:, :] = jnp.sum(both, axis=0)

    if needs_mask:
        last = pl.num_programs(0) - 1

        @pl.when(pl.program_id(0) != last)
        def _():
            reduce_and_store(s, t)

        @pl.when(pl.program_id(0) == last)
        def _():
            # The last block's DMA window may extend past the array; contents
            # there are unspecified, so mask BOTH s and t (garbage t would
            # otherwise pollute the s+t denominator).  The prefix length is a
            # multiple of the lane width, so a row-granular mask suffices.
            row = lax.broadcasted_iota(jnp.int32, (block_rows, _LANES), 0)
            rows_left = valid_rows - last * block_rows
            m = row < rows_left
            reduce_and_store(jnp.where(m, s, 0.0), jnp.where(m, t, 0.0))
    else:
        reduce_and_store(s, t)


def dice_loss(inputs, targets, smooth=1.0):
    """Pallas implementation of DiceLoss.forward.

    inputs, targets: arrays of identical shape (any rank); returns scalar f32.
    `smooth` is applied in the wrapper (supports arbitrary / traced values).
    """
    assert inputs.shape == targets.shape

    x = jnp.ravel(inputs)          # free reshape; native dtype streamed
    t = jnp.ravel(targets)
    n = x.shape[0]

    n_main = n - (n % _TILE)       # aligned prefix handled by the kernel
    inter = jnp.float32(0.0)
    denom = jnp.float32(0.0)

    if n_main:
        rows = n_main // _LANES                    # always a multiple of 8
        block_rows = min(_MAX_BLOCK_ROWS, rows)
        grid = pl.cdiv(rows, block_rows)
        needs_mask = (grid * block_rows) != rows   # only last block can OOB

        x2 = x[:n_main].reshape(rows, _LANES)      # contiguous view, no copy
        t2 = t[:n_main].reshape(rows, _LANES)

        kernel = functools.partial(
            _dice_partial_kernel,
            block_rows=block_rows,
            valid_rows=rows,
            needs_mask=needs_mask,
        )

        parts = pl.pallas_call(
            kernel,
            out_shape=jax.ShapeDtypeStruct((grid, 2 * _SUBLANES, _LANES),
                                           jnp.float32),
            grid_spec=pltpu.PrefetchScalarGridSpec(
                num_scalar_prefetch=0,
                grid=(grid,),
                in_specs=[
                    pl.BlockSpec((block_rows, _LANES), lambda i: (i, 0)),
                    pl.BlockSpec((block_rows, _LANES), lambda i: (i, 0)),
                ],
                out_specs=pl.BlockSpec((1, 2 * _SUBLANES, _LANES),
                                       lambda i: (i, 0, 0)),
            ),
            compiler_params=pltpu.CompilerParams(
                dimension_semantics=("parallel",),
                vmem_limit_bytes=32 << 20,
            ),
        )(x2, t2)

        inter = inter + jnp.sum(parts[:, :_SUBLANES, :])
        denom = denom + jnp.sum(parts[:, _SUBLANES:, :])

    if n_main != n:
        # <=1023-element ragged tail: plain jnp, avoids a full jnp.pad copy
        # (which would roughly double HBM traffic for this mem-bound op).
        x_tail = x[n_main:].astype(jnp.float32)
        t_tail = t[n_main:].astype(jnp.float32)
        s_tail = jax.nn.sigmoid(x_tail)
        inter = inter + jnp.sum(s_tail * t_tail)
        denom = denom + jnp.sum(s_tail) + jnp.sum(t_tail)

    dice = (2.0 * inter + smooth) / (denom + smooth)
    return 1.0 - dice


def _dice_ref(inputs, targets, smooth=1.0):
    s = jax.nn.sigmoid(inputs.astype(jnp.float32)).ravel()
    t = targets.astype(jnp.float32).ravel()
    inter = jnp.sum(s * t)
    dice = (2.0 * inter + smooth) / (jnp.sum(s) + jnp.sum(t) + smooth)
    return 1.0 - dice


if __name__ == "__main__":
    key = jax.random.PRNGKey(0)
    k1, k2 = jax.random.split(key)
    # Small shapes consistent with a segmentation logit/target pair (NCHW).
    x = jax.random.normal(k1, (2, 4, 16, 16), dtype=jnp.float32)
    tgt = (jax.random.uniform(k2, (2, 4, 16, 16)) > 0.5).astype(jnp.float32)

    loss = jax.block_until_ready(dice_loss(x, tgt))
    ref = jax.block_until_ready(_dice_ref(x, tgt))

    assert jnp.allclose(loss, ref, atol=1e-5, rtol=1e-5), (loss, ref)
    print("KERNEL_OK")
</pallas_src>

<mosaic_0001>
module attributes {stable_mosaic.version = 11 : i64} {
  func.func @_dice_partial_kernel(%arg0: i32, %arg1: memref<16x128xf32, #tpu.memory_space<vmem>>, %arg2: memref<16x128xf32, #tpu.memory_space<vmem>>, %arg3: memref<1x16x128xf32, #tpu.memory_space<vmem>>) attributes {dimension_semantics = [#tpu.dimension_semantics<parallel>], iteration_bounds = array<i64: 1>, scalar_prefetch = 0 : i64, scratch_operands = 0 : i64, tpu.core_type = #tpu.core_type<tc>, window_params = [{transform_indices = @transform_0, window_bounds = array<i64: 16, 128>}, {transform_indices = @transform_1, window_bounds = array<i64: 16, 128>}, {transform_indices = @transform_2, window_bounds = array<i64: 1, 16, 128>}]} {
    %c0 = arith.constant 0 : index
    %c0_0 = arith.constant 0 : index
    %0 = vector.load %arg1[%c0, %c0_0] : memref<16x128xf32, #tpu.memory_space<vmem>>, vector<16x128xf32>
    %c0_1 = arith.constant 0 : index
    %c0_2 = arith.constant 0 : index
    %1 = vector.load %arg2[%c0_1, %c0_2] : memref<16x128xf32, #tpu.memory_space<vmem>>, vector<16x128xf32>
    %cst = arith.constant 5.000000e-01 : f32
    %2 = vector.broadcast %cst : f32 to vector<16x128xf32>
    %3 = arith.mulf %2, %0 : vector<16x128xf32>
    %4 = math.tanh %3 : vector<16x128xf32>
    %cst_3 = arith.constant 5.000000e-01 : f32
    %5 = vector.broadcast %cst_3 : f32 to vector<16x128xf32>
    %6 = arith.mulf %5, %4 : vector<16x128xf32>
    %cst_4 = arith.constant 5.000000e-01 : f32
    %7 = vector.broadcast %cst_4 : f32 to vector<16x128xf32>
    %8 = arith.addf %6, %7 : vector<16x128xf32>
    %9 = arith.mulf %8, %1 : vector<16x128xf32>
    %10 = vector.shape_cast %9 : vector<16x128xf32> to vector<2x8x128xf32>
    %11 = arith.addf %8, %1 : vector<16x128xf32>
    %12 = vector.shape_cast %11 : vector<16x128xf32> to vector<2x8x128xf32>
    %cst_5 = arith.constant dense<0.000000e+00> : vector<8x128xf32>
    %13 = vector.multi_reduction <add>, %10, %cst_5 [0] : vector<2x8x128xf32> to vector<8x128xf32>
    %c0_6 = arith.constant 0 : index
    %c0_7 = arith.constant 0 : index
    %c0_8 = arith.constant 0 : index
    %14 = vector.load %arg3[%c0_6, %c0_7, %c0_8] : memref<1x16x128xf32, #tpu.memory_space<vmem>>, vector<1x8x128xf32>
    %15 = vector.shape_cast %14 : vector<1x8x128xf32> to vector<8x128xf32>
    %16 = vector.shape_cast %13 : vector<8x128xf32> to vector<1x8x128xf32>
    tpu.vector_store %arg3[%c0_6, %c0_7, %c0_8], %16 {strides = array<i32>} : memref<1x16x128xf32, #tpu.memory_space<vmem>>, vector<1x8x128xf32>,
    %cst_9 = arith.constant dense<0.000000e+00> : vector<8x128xf32>
    %17 = vector.multi_reduction <add>, %12, %cst_9 [0] : vector<2x8x128xf32> to vector<8x128xf32>
    %c0_10 = arith.constant 0 : index
    %c8 = arith.constant 8 : index
    %c0_11 = arith.constant 0 : index
    %18 = vector.load %arg3[%c0_10, %c8, %c0_11] : memref<1x16x128xf32, #tpu.memory_space<vmem>>, vector<1x8x128xf32>
    %19 = vector.shape_cast %18 : vector<1x8x128xf32> to vector<8x128xf32>
    %20 = vector.shape_cast %17 : vector<8x128xf32> to vector<1x8x128xf32>
    tpu.vector_store %arg3[%c0_10, %c8, %c0_11], %20 {strides = array<i32>} : memref<1x16x128xf32, #tpu.memory_space<vmem>>, vector<1x8x128xf32>,
    return
  }
  func.func @transform_0(%arg0: i32) -> (i32, i32) {
    %c0_i32 = arith.constant 0 : i32
    %c0_i32_0 = arith.constant 0 : i32
    return %arg0, %c0_i32 : i32, i32
  }
  func.func @transform_1(%arg0: i32) -> (i32, i32) {
    %c0_i32 = arith.constant 0 : i32
    %c0_i32_0 = arith.constant 0 : i32
    return %arg0, %c0_i32 : i32, i32
  }
  func.func @transform_2(%arg0: i32) -> (i32, i32, i32) {
    %c0_i32 = arith.constant 0 : i32
    %c0_i32_0 = arith.constant 0 : i32
    %c0_i32_1 = arith.constant 0 : i32
    return %arg0, %c0_i32, %c0_i32_0 : i32, i32, i32
  }
}

</mosaic_0001>

<llo_original>
// kernel: tpu_custom_call.1
$region0: #{tpu_custom_call.1}
  #allocation0 [shape = 'u32[]', space=smem, size = 0x4, offset = 0x4, fixed_abs, tag = 'smem constant byte address 0x4 - core index']
  #allocation1 [shape = 'u32[72,128]{1,0:T(1,128)}', space=vmem, size = 0x9000, scoped, tag = 'internal scratch']
  %s0 = inlined_call_operand.hbm [shape: f32[16,128], index: 0, kind: input, shape index: {}]
  %s1 = inlined_call_operand.hbm [shape: f32[16,128], index: 1, kind: input, shape index: {}]
  %s2 = inlined_call_operand.hbm [shape: f32[1,16,128], index: 2, kind: output, shape index: {}]
  %s3 = sld [smem:[#allocation0]]
  $region26: #{tpu_custom_call.1} parent=0
    _
  %s5 = ssub.s32 1, %s3
  %s6 = scalar_select 0, %s5, %s3
  $region1: #{tpu_custom_call.1} parent=0
    #allocation2 [shape = 'u8[8192]{0}', space=vmem, size = 0x2000, scoped, tag = 'input window, operand 0, single buffered']
    #allocation3 [shape = 's32[1]{0}', space=sflag, size = 0x4, scoped, tag = 'scoped memory for tpu_custom_call.1']
    #allocation4 [shape = 's32[1]{0}', space=sflag, size = 0x4, scoped, tag = 'scoped memory for tpu_custom_call.1']
    #allocation5 [shape = 'u8[8192]{0}', space=vmem, size = 0x2000, scoped, tag = 'input window, operand 1, single buffered']
    #allocation6 [shape = 's32[1]{0}', space=sflag, size = 0x4, scoped, tag = 'scoped memory for tpu_custom_call.1']
    #allocation7 [shape = 'u8[8192]{0}', space=vmem, size = 0x2000, scoped, tag = 'output window, operand 0, single buffered']
    %7 = vsyncpa [#allocation3], 0
    %8 = vsyncpa [#allocation6], 0
    %9 = vsyncpa [#allocation4], 0
    // Predicated region
    $region2: #{tpu_custom_call.1} parent=1 // pred_check
      _
    $region3: #{tpu_custom_call.1} parent=1 // pred_check_branch
      %11 = sbr.rel (0) target = $region5
    $region4: #{tpu_custom_call.1} parent=1 // pred_region
      %13 = vsyncadd [#allocation3], 0
      %s14 = sshll.u32 %s0, 4
      %s15 = int_to_ptr.hbm [resolvable:$true] %s14
      %s16 = sshll.u32 [#allocation2], 4
      %s17 = int_to_ptr.vmem [resolvable:$true] %s16
      %22 = dma.hbm_to_vmem [thread:$0]  %s15, 256, %s17, [#allocation3], 128, 128, 8
    $region5: #{tpu_custom_call.1} parent=1 // pred_fallthru
      _
    // Predicated region
    $region6: #{tpu_custom_call.1} parent=1 // pred_check
      _
    $region7: #{tpu_custom_call.1} parent=1 // pred_check_branch
      %24 = sbr.rel (0) target = $region9
    $region8: #{tpu_custom_call.1} parent=1 // pred_region
      %26 = vsyncadd [#allocation6], 0
      %s27 = sshll.u32 %s1, 4
      %s28 = int_to_ptr.hbm [resolvable:$true] %s27
      %s29 = sshll.u32 [#allocation5], 4
      %s30 = int_to_ptr.vmem [resolvable:$true] %s29
      %35 = dma.hbm_to_vmem [thread:$0]  %s28, 256, %s30, [#allocation6], 128, 128, 8
    $region9: #{tpu_custom_call.1} parent=1 // pred_fallthru
      _
    // Predicated region
    $region10: #{tpu_custom_call.1} parent=1 // pred_check
      _
    $region11: #{tpu_custom_call.1} parent=1 // pred_check_branch
      %37 = sbr.rel (0) target = $region13
    $region12: #{tpu_custom_call.1} parent=1 // pred_region
      %39 = dma.done [#allocation3], 256
    $region13: #{tpu_custom_call.1} parent=1 // pred_fallthru
      _
    // Predicated region
    $region14: #{tpu_custom_call.1} parent=1 // pred_check
      _
    $region15: #{tpu_custom_call.1} parent=1 // pred_check_branch
      %41 = sbr.rel (0) target = $region17
    $region16: #{tpu_custom_call.1} parent=1 // pred_region
      %43 = dma.done [#allocation6], 256
    $region17: #{tpu_custom_call.1} parent=1 // pred_fallthru
      _
    %v44 = vld [vmem:[#allocation2] sm:$0xff]
    %v45 = vld [vmem:[#allocation2 + $0x8] sm:$0xff]
    %v46 = vld [vmem:[#allocation5] sm:$0xff]
    %v47 = vld [vmem:[#allocation5 + $0x8] sm:$0xff]
    %v48 = vmul.f32 %v44, 0.5
    %v49 = vmul.f32 %v45, 0.5
    %v50 = vtanh.pop %v48
    %v51 = vtanh.pop %v49
    %v52 = vmul.f32 %v50, 0.5
    %v53 = vmul.f32 %v51, 0.5
    %v54 = vadd.f32 %v52, 0.5
    %v55 = vadd.f32 %v53, 0.5
    %v56 = vmul.f32 %v54, %v46
    %v57 = vmul.f32 %v55, %v47
    %v58 = vadd.f32 %v54, %v46
    %v59 = vadd.f32 %v55, %v47
    %v60 = vadd.f32 %v56, %v57
    %61 = vst [vmem:[#allocation7] sm:$0xff] %v60
    %v62 = vadd.f32 %v58, %v59
    %63 = vst [vmem:[#allocation7 + $0x8] sm:$0xff] %v62
    // Predicated region
    $region18: #{tpu_custom_call.1} parent=1 // pred_check
      _
    $region19: #{tpu_custom_call.1} parent=1 // pred_check_branch
      %65 = sbr.rel (0) target = $region21
    $region20: #{tpu_custom_call.1} parent=1 // pred_region
      %67 = vsyncadd [#allocation4], 0
      %s68 = sshll.u32 [#allocation7], 4
      %s69 = int_to_ptr.vmem [resolvable:$true] %s68
      %s70 = sshll.u32 %s2, 4
      %s71 = int_to_ptr.hbm [resolvable:$true] %s70
      %76 = dma.vmem_to_hbm [thread:$0]  %s69, 256, %s71, [#allocation4], 128, 128, 8
    $region21: #{tpu_custom_call.1} parent=1 // pred_fallthru
      _
    // Predicated region
    $region22: #{tpu_custom_call.1} parent=1 // pred_check
      _
    $region23: #{tpu_custom_call.1} parent=1 // pred_check_branch
      %78 = sbr.rel (0) target = $region25
    $region24: #{tpu_custom_call.1} parent=1 // pred_region
      %80 = dma.done [#allocation4], 256
    $region25: #{tpu_custom_call.1} parent=1 // pred_fallthru
      _
    %81 = vsyncpa [#allocation3], 1
    %82 = vsyncpa [#allocation6], 1
    %83 = vsyncpa [#allocation4], 1

</llo_original>
